<compile_context>
chip_gen: v6e
topology: v6e:2x2x1
jax: 0.10.0
libtpu: 0.0.40
codegen_flags: <defaults>
</compile_context>

<pallas_src>
import math

import numpy as np
import jax
import jax.numpy as jnp
from jax.experimental import pallas as pl
from jax.experimental.pallas import tpu as pltpu

PART_DIM = 9
LOAD_SIZE = 64


# ---------------------------------------------------------------------------
# Pallas kernel 1: batched mask binarization
#   grid = (#unique (batch, idx) pairs,)  [parallel]
#   The (batch, idx) pairs are scalar-prefetched into SMEM; the batch index
#   drives the input index_map (data-dependent block selection).  Planes use a
#   dense (HW/128, 128) layout so both sublane and lane dims are packed.
# ---------------------------------------------------------------------------

def _binarize_kernel(bsel_ref, val_ref, ins_ref, mask_ref):
    del bsel_ref  # only used by the index_map
    p = pl.program_id(0)
    v = val_ref[p].astype(jnp.float32)
    mask_ref[...] = jnp.where(ins_ref[...] == v,
                              jnp.float32(1.0), jnp.float32(0.0))


def binarize_batch(planes_bhw, b_sel, values):
    """planes_bhw: (B, H, W) f32; b_sel/values: (P,) int32.

    Returns (P, H, W) f32 masks with mask[p] = (planes[b_sel[p]] == values[p]).
    """
    B, H, W = planes_bhw.shape
    HW = H * W
    HWp = ((HW + 127) // 128) * 128
    R = HWp // 128
    flat = planes_bhw.reshape(B, HW)
    if HWp != HW:
        flat = jnp.pad(flat, ((0, 0), (0, HWp - HW)))
    planes = flat.reshape(B, R, 128)
    P = int(b_sel.shape[0])
    out = pl.pallas_call(
        _binarize_kernel,
        out_shape=jax.ShapeDtypeStruct((P, R, 128), jnp.float32),
        grid_spec=pltpu.PrefetchScalarGridSpec(
            num_scalar_prefetch=2,
            grid=(P,),
            in_specs=[pl.BlockSpec((1, R, 128),
                                   lambda p, bsel, vals: (bsel[p], 0, 0))],
            out_specs=pl.BlockSpec((1, R, 128),
                                   lambda p, bsel, vals: (p, 0, 0)),
        ),
        compiler_params=pltpu.CompilerParams(
            dimension_semantics=("parallel",)),
    )(jnp.asarray(b_sel, jnp.int32), jnp.asarray(values, jnp.int32), planes)
    return out.reshape(P, HWp)[:, :HW].reshape(P, H, W)


# ---------------------------------------------------------------------------
# Pallas kernel 2: fused per-pixel projection + epilogue (the "model" hot path)
#   fea = tanh(x @ w_fea + b_fea + e_fea[sem]);  syn likewise.
#   - x rows keep their true K=3 last dim (no host-side zero padding).
#   - K=3 contraction via broadcasts on the VPU (kernel is HBM-bound; MXU adds
#     nothing at K=3), tanh goes to the EUP slot, adds to the VPU.
#   - Two lane-exact outputs (36 / 9 lanes): the result makes exactly one HBM
#     trip; no padded-128 slab and no post-kernel slice/copy.
# ---------------------------------------------------------------------------

def _proj_kernel(x_ref, wf_ref, ws_ref, ef_ref, es_ref, fea_ref, syn_ref):
    x = x_ref[...]                              # (tm, 3)
    x0, x1, x2 = x[:, 0:1], x[:, 1:2], x[:, 2:3]
    wf = wf_ref[...]                            # (3, Cf)
    ws = ws_ref[...]                            # (3, Cs)
    yf = x0 * wf[0:1, :] + x1 * wf[1:2, :] + x2 * wf[2:3, :]
    ys = x0 * ws[0:1, :] + x1 * ws[1:2, :] + x2 * ws[2:3, :]
    fea_ref[...] = jnp.tanh(yf + ef_ref[0])     # ef_ref: (1, 1, Cf)
    syn_ref[...] = jnp.tanh(ys + es_ref[0])


def fused_projection(x_rows, w_fea, w_syn, ef_rows, es_rows, hw, tm=2048):
    """x_rows: (M, 3) channels-last pixel rows, M = N*hw.
    ef_rows/es_rows: (N, 1, C) per-image (embedding + bias) rows.
    Returns fea (M, Cf) and syn (M, Cs), already tanh'd."""
    M = x_rows.shape[0]
    Cf = w_fea.shape[1]
    Cs = w_syn.shape[1]
    tm = min(tm, hw)
    assert hw % tm == 0 and M % hw == 0
    blocks_per_img = hw // tm
    img = lambda i: i // blocks_per_img
    fea, syn = pl.pallas_call(
        _proj_kernel,
        out_shape=(jax.ShapeDtypeStruct((M, Cf), jnp.float32),
                   jax.ShapeDtypeStruct((M, Cs), jnp.float32)),
        grid=(M // tm,),
        in_specs=[
            pl.BlockSpec((tm, 3), lambda i: (i, 0)),
            pl.BlockSpec((3, Cf), lambda i: (0, 0)),
            pl.BlockSpec((3, Cs), lambda i: (0, 0)),
            pl.BlockSpec((1, 1, Cf), lambda i: (img(i), 0, 0)),
            pl.BlockSpec((1, 1, Cs), lambda i: (img(i), 0, 0)),
        ],
        out_specs=(pl.BlockSpec((tm, Cf), lambda i: (i, 0)),
                   pl.BlockSpec((tm, Cs), lambda i: (i, 0))),
        compiler_params=pltpu.CompilerParams(
            dimension_semantics=("parallel",)),
    )(x_rows, w_fea, w_syn, ef_rows, es_rows)
    return fea, syn


# ---------------------------------------------------------------------------
# Pallas kernel 3: fused crop-window blend (fea + ins + part in one call)
#   composed*(1-m) + value*m over only the crop window, three outputs, so the
#   mask is read once and no full-canvas zero-scatter / full-plane blend is
#   ever done.  Lane axis = flattened window, padded to a multiple of 128 and
#   tiled with a parallel grid, so blocks stay small for any window size.
# ---------------------------------------------------------------------------

def _blend3_kernel(cf_ref, vf_ref, cp_ref, vp_ref, ci_ref, m_ref,
                   of_ref, op_ref, oi_ref):
    m = m_ref[...]                   # (1, TL), broadcast over channels
    one_m = 1.0 - m
    of_ref[...] = cf_ref[...] * one_m + vf_ref[...] * m
    op_ref[...] = cp_ref[...] * one_m + vp_ref[...] * m
    # matches the reference exactly: composed_ins*(1-m) + m*m  (m is binary)
    oi_ref[...] = ci_ref[...] * one_m + m * m


def blend3(comp_fea, val_fea, comp_part, val_part, comp_ins, mask,
           tl_target=2048):
    """All args are (C, ch, cw) crop-window tensors (mask/ins have C == 1).
    Returns blended (fea, part, ins) windows with the same shapes."""
    Cf, ch, cw = comp_fea.shape
    Cp = comp_part.shape[0]
    L = ch * cw
    TL = min(tl_target, ((L + 127) // 128) * 128)
    Lp = ((L + TL - 1) // TL) * TL

    def prep(x):
        x2 = x.reshape(x.shape[0], L)
        if Lp != L:
            x2 = jnp.pad(x2, ((0, 0), (0, Lp - L)))
        return x2

    cf, vf, cp_, vp, ci, m = map(prep, (comp_fea, val_fea, comp_part,
                                        val_part, comp_ins, mask))
    spec = lambda C: pl.BlockSpec((C, TL), lambda i: (0, i))
    of, op_, oi = pl.pallas_call(
        _blend3_kernel,
        out_shape=(jax.ShapeDtypeStruct((Cf, Lp), jnp.float32),
                   jax.ShapeDtypeStruct((Cp, Lp), jnp.float32),
                   jax.ShapeDtypeStruct((1, Lp), jnp.float32)),
        grid=(Lp // TL,),
        in_specs=[spec(Cf), spec(Cf), spec(Cp), spec(Cp), spec(1), spec(1)],
        out_specs=(spec(Cf), spec(Cp), spec(1)),
        compiler_params=pltpu.CompilerParams(
            dimension_semantics=("parallel",)),
    )(cf, vf, cp_, vp, ci, m)
    unprep = lambda x, C: x[:, :L].reshape(C, ch, cw)
    return unprep(of, Cf), unprep(op_, Cp), unprep(oi, 1)


# ---------------------------------------------------------------------------
# Glue: resize helper (F.interpolate equivalent, NHWC)
# ---------------------------------------------------------------------------

def resize_nhwc(x, hw, method):
    # TODO(synk): torch 'nearest' uses floor(dst*scale) source indexing while
    # jax.image.resize uses half-pixel rounding; mask boundary pixels can
    # differ by one pixel from the PyTorch reference.
    return jax.image.resize(x, (x.shape[0], hw[0], hw[1], x.shape[3]),
                            method=method, antialias=False)


# ---------------------------------------------------------------------------
# PartGenerator in JAX
# ---------------------------------------------------------------------------

class Opt:
    def __init__(self):
        self.part_nc = 4
        self.categorys = [0, 1, 2, 3]
        self.dataset_mode = "ipose"
        self.ft = False


class PartGeneratorJAX:
    def __init__(self, opt, key):
        self.opt = opt
        self.part_dim = PART_DIM
        self.fea_dim = opt.part_nc * self.part_dim
        self.load_size = LOAD_SIZE
        self.catgory_dict = {v: i for i, v in enumerate(opt.categorys)}
        n_cls = len(opt.categorys)
        k1, k2, k3, k4, k5, k6 = jax.random.split(key, 6)
        # TODO(synk): PartGeneratorAttn's architecture is not provided in the
        # reference; stood in by a per-pixel linear projection (fused Pallas
        # kernel above) + class embedding + tanh.
        # Weights are host constants prepared once here, not per call.
        self.w_fea = jax.random.normal(k1, (3, self.fea_dim), jnp.float32) * 0.1
        self.w_syn = jax.random.normal(k2, (3, self.part_dim), jnp.float32) * 0.1
        self.b_fea = jax.random.normal(k3, (self.fea_dim,), jnp.float32) * 0.01
        self.b_syn = jax.random.normal(k4, (self.part_dim,), jnp.float32) * 0.01
        self.e_fea = jax.random.normal(k5, (n_cls, self.fea_dim), jnp.float32) * 0.1
        self.e_syn = jax.random.normal(k6, (n_cls, self.part_dim), jnp.float32) * 0.1
        # bias folded into the per-class rows once (fused epilogue add).
        self.eb_fea = self.e_fea + self.b_fea[None, :]
        self.eb_syn = self.e_syn + self.b_syn[None, :]

    # ---- stand-in for PartGeneratorAttn.forward(x, semantics, return_fea=True)
    def model_forward(self, x_nhwc3, semantics):
        """x_nhwc3: (N, 64, 64, 3) channels-last. Returns (syn, fea) in NHWC."""
        N = x_nhwc3.shape[0]
        hw = self.load_size * self.load_size
        rows = x_nhwc3.reshape(N * hw, 3)            # already channels-last
        sem = jnp.asarray(semantics, jnp.int32)
        ef = self.eb_fea[sem][:, None, :]            # (N, 1, fea_dim)
        es = self.eb_syn[sem][:, None, :]            # (N, 1, part_dim)
        fea, syn = fused_projection(rows, self.w_fea, self.w_syn, ef, es, hw)
        x_fea = fea.reshape(N, self.load_size, self.load_size, self.fea_dim)
        x_syn = syn.reshape(N, self.load_size, self.load_size, self.part_dim)
        return x_syn, x_fea

    def get_cropparams(self, instance, crop_params, ins_num):
        params = []
        for b in range(instance.shape[0]):
            for ii in range(int(ins_num[b])):
                idx, hs, he, ws, we, H, W = [int(v) for v in crop_params[b][ii]]
                params.append([b, idx, hs, he, ws, we, H, W])
        return params

    def decompose(self, instance, merged_params):
        cropped_instances, batches, semantics, params = [], [], [], []
        B, _, Hi, Wi = instance.shape
        # 1) host-side crop-bound adjustment + dedup of (batch, idx) pairs
        adj, uniq, uniq_list = [], {}, []
        for param in merged_params:
            b, idx, hs, he, ws, we, H, W = [int(v) for v in param]
            hs = max(0, hs - 2)
            ws = max(ws - 2, 0)
            he = min(he + 2, Hi)
            we = min(we + 2, Wi)
            if (he - hs) % 2 == 1 and he + 1 <= Hi:
                he = he + 1
            if (he - hs) % 2 == 1 and hs - 1 >= 0:
                hs = hs - 1
            if (we - ws) % 2 == 1 and we + 1 <= Wi:
                we = we + 1
            if (we - ws) % 2 == 1 and ws - 1 >= 0:
                ws = ws - 1
            if 'ade20k' in self.opt.dataset_mode or 'coco' in self.opt.dataset_mode:
                new_idx = idx % 1000
            else:
                new_idx = idx
            key = (b, new_idx)
            if key not in uniq:
                uniq[key] = len(uniq_list)
                uniq_list.append(key)
            adj.append((b, idx, hs, he, ws, we, H, W, uniq[key]))
        # 2) one batched Pallas binarize for all (deduped) instances
        b_sel = np.array([k[0] for k in uniq_list], np.int32)
        vals = np.array([k[1] for k in uniq_list], np.int32)
        masks = binarize_batch(instance[:, 0].astype(jnp.float32), b_sel, vals)
        # 3) per-instance crop/pad/resize bookkeeping (XLA glue, NHWC layout)
        for (b, idx, hs, he, ws, we, H, W, u) in adj:
            cropped = masks[u, hs:he, ws:we][None, :, :, None]   # (1, h, w, 1)
            location_param = [hs, he, ws, we, H, W]
            h, w = cropped.shape[1], cropped.shape[2]
            if H > W:
                r = H / W
                cropped = resize_nhwc(cropped, (int(h * r), w), 'nearest')
            elif W > H:
                r = W / H
                cropped = resize_nhwc(cropped, (h, int(w * r)), 'nearest')
            hh, ww = cropped.shape[1], cropped.shape[2]
            if hh > ww:
                r = (hh - ww) // 2
                cropped = jnp.pad(cropped, ((0, 0), (0, 0), (r, r), (0, 0)))
                crop_param = [0, 0, r, -r]
                resize_param = hh
            elif ww > hh:
                r = (ww - hh) // 2
                cropped = jnp.pad(cropped, ((0, 0), (r, r), (0, 0), (0, 0)))
                crop_param = [r, -r, 0, 0]
                resize_param = ww
            else:
                crop_param = [0, 0, 0, 0]
                resize_param = hh
            cropped = resize_nhwc(cropped, (self.load_size, self.load_size),
                                  'nearest')
            s = idx // 1000
            semantics.append(self.catgory_dict[s])
            cropped_instances.append(cropped)
            batches.append(b)
            params.append([location_param, crop_param, resize_param])
        return params, cropped_instances, batches, semantics

    def compose(self, composed_fea, composed_ins, composed_part,
                features, instances, parts, batches, params):
        # features/parts/instances are channels-last (N, 64, 64, C); the
        # composed canvases keep the module's NCHW layout.
        for idx in range(len(batches)):
            b = batches[idx]
            location_param, crop_param, resize_param = params[idx]
            fea = features[idx:idx + 1]
            ins = instances[idx:idx + 1]
            part = parts[idx:idx + 1]
            rp = resize_param
            resized_fea = resize_nhwc(fea, (rp, rp), 'bilinear')
            resized_ins = resize_nhwc(ins, (rp, rp), 'nearest')
            resized_part = resize_nhwc(part, (rp, rp), 'nearest')
            h0, h1 = crop_param[0], rp + crop_param[1]
            w0, w1 = crop_param[2], rp + crop_param[3]
            cropped_fea = resized_fea[:, h0:h1, w0:w1, :]
            cropped_ins = resized_ins[:, h0:h1, w0:w1, :]
            cropped_part = resized_part[:, h0:h1, w0:w1, :]
            hs, he, ws, we, H, W = location_param
            if H != W:
                cropped_fea = resize_nhwc(cropped_fea, (he - hs, we - ws),
                                          'bilinear')
                cropped_ins = resize_nhwc(cropped_ins, (he - hs, we - ws),
                                          'nearest')
                cropped_part = resize_nhwc(cropped_part, (he - hs, we - ws),
                                           'nearest')
            # tiny window-sized transposes to CHW for the fused blend kernel
            val_fea = jnp.transpose(cropped_fea[0], (2, 0, 1))
            val_part = jnp.transpose(cropped_part[0], (2, 0, 1))
            mask = jnp.transpose(cropped_ins[0], (2, 0, 1))
            comp_fea_w = composed_fea[b, :, hs:he, ws:we]
            comp_ins_w = composed_ins[b, :, hs:he, ws:we]
            comp_part_w = composed_part[b, :, hs:he, ws:we]
            out_fea, out_part, out_ins = blend3(
                comp_fea_w, val_fea, comp_part_w, val_part, comp_ins_w, mask)
            composed_fea = composed_fea.at[b, :, hs:he, ws:we].set(out_fea)
            composed_ins = composed_ins.at[b, :, hs:he, ws:we].set(out_ins)
            composed_part = composed_part.at[b, :, hs:he, ws:we].set(out_part)
        return composed_fea, composed_ins, composed_part

    def forward(self, input, instance, crop_params, ins_num):
        B, _, H, W = instance.shape
        composed_fea = jnp.zeros((B, self.fea_dim, H, W), jnp.float32)
        composed_ins = jnp.zeros((B, 1, H, W), jnp.float32)
        composed_part = jnp.zeros((B, self.part_dim, H, W), jnp.float32)
        merged_params = self.get_cropparams(instance, crop_params, ins_num)
        # (training + opt.ft random-subset branch skipped: eval-mode forward)
        if len(merged_params) == 0:
            pass
        else:
            batch_size = 10
            iters = math.ceil(len(merged_params) / batch_size)
            for i in range(iters):
                params, cropped_instances, batches, semantics = self.decompose(
                    instance, merged_params[i * batch_size:(i + 1) * batch_size])
                batch_cropped = jnp.concatenate(
                    cropped_instances, axis=0).astype(jnp.float32)   # (N,64,64,1)
                batch_cropped3 = jnp.concatenate([batch_cropped] * 3, axis=-1)
                x_syn, x_fea = self.model_forward(batch_cropped3, semantics)
                composed_fea, composed_ins, composed_part = self.compose(
                    composed_fea, composed_ins, composed_part,
                    x_fea, batch_cropped, x_syn, batches, params)
        return composed_fea, composed_part


# ---------------------------------------------------------------------------
# Demo
# ---------------------------------------------------------------------------

if __name__ == "__main__":
    key = jax.random.PRNGKey(0)
    opt = Opt()
    gen = PartGeneratorJAX(opt, key)

    B, H, W = 2, 16, 16
    inst_np = np.zeros((B, 1, H, W), np.float32)
    inst_np[0, 0, 2:12, 2:12] = 1001.0   # class 1, instance 1
    inst_np[1, 0, 1:11, 3:15] = 2003.0   # class 2, instance 3
    instance = jnp.asarray(inst_np)

    # crop_params[b][ii] = [idx, hs, he, ws, we, H_obj, W_obj]
    crop_params = [
        [[1001, 4, 10, 4, 10, 16, 16]],
        [[2003, 3, 9, 5, 13, 16, 12]],
    ]
    ins_num = [1, 1]
    input_img = jnp.zeros((B, 3, H, W), jnp.float32)  # unused (API parity)

    composed_fea, composed_part = gen.forward(input_img, instance,
                                              crop_params, ins_num)
    composed_fea = jax.block_until_ready(composed_fea)
    composed_part = jax.block_until_ready(composed_part)

    assert composed_fea.shape == (B, opt.part_nc * PART_DIM, H, W)
    assert composed_part.shape == (B, PART_DIM, H, W)
    assert bool(jnp.isfinite(composed_fea).all())
    assert bool(jnp.isfinite(composed_part).all())
    print("KERNEL_OK")
</pallas_src>

<mosaic_0001>
module attributes {stable_mosaic.version = 11 : i64} {
  func.func @_binarize_kernel(%arg0: i32, %arg1: memref<2xi32, #tpu.memory_space<smem>>, %arg2: memref<2xi32, #tpu.memory_space<smem>>, %arg3: memref<1x2x128xf32, #tpu.memory_space<vmem>>, %arg4: memref<1x2x128xf32, #tpu.memory_space<vmem>>) attributes {dimension_semantics = [#tpu.dimension_semantics<parallel>], iteration_bounds = array<i64: 2>, scalar_prefetch = 2 : i64, scratch_operands = 0 : i64, tpu.core_type = #tpu.core_type<tc>, window_params = [{transform_indices = @transform_0, window_bounds = array<i64: 1, 2, 128>}, {transform_indices = @transform_1, window_bounds = array<i64: 1, 2, 128>}]} {
    %0 = arith.index_cast %arg0 : i32 to index
    %1 = memref.load %arg2[%0] : memref<2xi32, #tpu.memory_space<smem>>
    %2 = arith.sitofp %1 : i32 to f32
    %c0 = arith.constant 0 : index
    %c0_0 = arith.constant 0 : index
    %c0_1 = arith.constant 0 : index
    %3 = vector.load %arg3[%c0, %c0_0, %c0_1] : memref<1x2x128xf32, #tpu.memory_space<vmem>>, vector<1x2x128xf32>
    %4 = vector.broadcast %2 : f32 to vector<1x2x128xf32>
    %5 = arith.cmpf oeq, %3, %4 : vector<1x2x128xf32>
    %cst = arith.constant 1.000000e+00 : f32
    %cst_2 = arith.constant 0.000000e+00 : f32
    %6 = vector.broadcast %cst : f32 to vector<1x2x128xf32>
    %7 = vector.broadcast %cst_2 : f32 to vector<1x2x128xf32>
    %8 = arith.select %5, %6, %7 : vector<1x2x128xi1>, vector<1x2x128xf32>
    %c0_3 = arith.constant 0 : index
    %c0_4 = arith.constant 0 : index
    %c0_5 = arith.constant 0 : index
    %9 = vector.load %arg4[%c0_3, %c0_4, %c0_5] : memref<1x2x128xf32, #tpu.memory_space<vmem>>, vector<1x2x128xf32>
    tpu.vector_store %arg4[%c0_3, %c0_4, %c0_5], %8 {strides = array<i32>} : memref<1x2x128xf32, #tpu.memory_space<vmem>>, vector<1x2x128xf32>,
    return
  }
  func.func @transform_0(%arg0: i32, %arg1: memref<2xi32, #tpu.memory_space<smem>>, %arg2: memref<2xi32, #tpu.memory_space<smem>>) -> (i32, i32, i32) {
    %0 = arith.index_cast %arg0 : i32 to index
    %1 = memref.load %arg1[%0] : memref<2xi32, #tpu.memory_space<smem>>
    %c0_i32 = arith.constant 0 : i32
    %c0_i32_0 = arith.constant 0 : i32
    %c0_i32_1 = arith.constant 0 : i32
    return %1, %c0_i32, %c0_i32_0 : i32, i32, i32
  }
  func.func @transform_1(%arg0: i32, %arg1: memref<2xi32, #tpu.memory_space<smem>>, %arg2: memref<2xi32, #tpu.memory_space<smem>>) -> (i32, i32, i32) {
    %c0_i32 = arith.constant 0 : i32
    %c0_i32_0 = arith.constant 0 : i32
    %c0_i32_1 = arith.constant 0 : i32
    return %arg0, %c0_i32, %c0_i32_0 : i32, i32, i32
  }
}

</mosaic_0001>

<llo_original>
// kernel: tpu_custom_call.1
$region0: #{tpu_custom_call.1}
  #allocation0 [shape = 'u32[]', space=smem, size = 0x4, offset = 0x4, fixed_abs, tag = 'smem constant byte address 0x4 - core index']
  #allocation1 [shape = 'u32[144,128]{1,0:T(1,128)}', space=vmem, size = 0x12000, scoped, tag = 'internal scratch']
  #allocation2 [shape = 's32[1]{0}', space=sflag, size = 0x4, scoped, tag = 'scoped memory for tpu_custom_call.1']
  #allocation3 [shape = 'u8[512]{0}', space=smem, size = 0x200, scoped, tag = 'prefetched SMEM operand 0']
  #allocation4 [shape = 'u8[512]{0}', space=smem, size = 0x200, scoped, tag = 'prefetched SMEM operand 1']
  %s0 = inlined_call_operand.hbm [shape: s32[2], index: 0, kind: input, shape index: {}]
  %s1 = inlined_call_operand.vmem [shape: s32[2], index: 1, kind: input, shape index: {}]
  %s2 = inlined_call_operand.hbm [shape: f32[2,2,128], index: 2, kind: input, shape index: {}]
  %s3 = inlined_call_operand.hbm [shape: f32[2,2,128], index: 3, kind: output, shape index: {}]
  %s4 = sld [smem:[#allocation0]]
  $region41: #{tpu_custom_call.1} parent=0
    _
  %s6 = ssub.s32 1, %s4
  %s7 = scalar_select 0, %s6, %s4
  %9 = dma.hbm_to_smem %s0, 16, [#allocation3], [#allocation2]
  %s10 = sshll.u32 %s1, 4
  %s11 = int_to_ptr.vmem [resolvable:$true] %s10
  %13 = dma.vmem_to_smem %s11, 16, [#allocation4], [#allocation2]
  %14 = dma.done [#allocation2], 32
  %15 = sfence
  $region1: #{tpu_custom_call.1} parent=0
    #allocation5 [shape = 'u8[2048]{0}', space=vmem, size = 0x800, scoped, tag = 'input window, operand 2']
    #allocation6 [shape = 's32[2]{0}', space=sflag, size = 0x8, scoped, tag = 'scoped memory for tpu_custom_call.1']
    #allocation7 [shape = 's32[2]{0}', space=sflag, size = 0x8, scoped, tag = 'scoped memory for tpu_custom_call.1']
    #allocation8 [shape = 'u8[2048]{0}', space=vmem, size = 0x800, scoped, tag = 'output window, operand 0']
    %16 = vsyncpa [#allocation6], 0
    %s17 = scalar_lea.sflag [#allocation6], 1
    %18 = vsyncpa %s17, 0
    %19 = vsyncpa [#allocation7], 0
    %s20 = scalar_lea.sflag [#allocation7], 1
    %21 = vsyncpa %s20, 0
    loop: start=0, step=1, limit=4
    $region2: #{tpu_custom_call.1} parent=1 // loop_pre_header
      _
    $region3: #{tpu_custom_call.1} parent=1 // loop_header
      %s23 = sphi 0, %s27
      %p24 = scmp.ge.s32.totalorder %s23, 4
      %s35 = sphi 0, %s37
      %s38 = sphi 0, %s35
      %s39 = sphi 0, %s38
      %s55 = sphi 0, %s39
      %s61 = sphi 0, %s63
      %s64 = sphi 0, %s61
      %s65 = sphi 0, %s64
      %s81 = sphi 0, %s65
    $region4: #{tpu_custom_call.1} parent=1 // loop_header_branch
      %26 = sbr.rel (%p24) target = $region8
    $region5: #{tpu_custom_call.1} parent=1 // loop_body
      %s28 = ssub.s32 %s23, 1
      %s29 = ssub.s32 %s23, 2
      %s30 = sadd.s32 %s23, 1
      %s31 = sld [smem:[#allocation3 + %s23]]
      %s32 = sld [smem:[#allocation3 + %s30]]
      %s33 = ssub.s32 %s31, %s32
      %p34 = scmp.eq.s32.totalorder %s33, 0
      %s36 = sadd.s32 %s35, 1
      %s37 = scalar_select %p34, %s35, %s36
      %p40 = pneg %p34
      %p41 = scmp.eq.s32.totalorder %s23, 1
      %p42 = por %p40, %p41
      %p43 = scmp.ne.s32.totalorder %s35, %s38
      %p44 = scmp.eq.s32.totalorder %s23, 0
      %p45 = por %p43, %p44
      %p46 = scmp.ne.s32.totalorder %s35, %s38
      %p47 = scmp.eq.s32.totalorder %s28, 1
      %p48 = por %p46, %p47
      %p49 = scmp.ne.s32.totalorder %s38, %s39
      %p50 = scmp.eq.s32.totalorder %s28, 0
      %p51 = por %p49, %p50
      %p52 = scmp.ne.s32.totalorder %s38, %s39
      %p53 = scmp.eq.s32.totalorder %s29, 1
      %p54 = por %p52, %p53
      %p56 = scmp.ne.s32.totalorder %s39, %s55
      %p57 = scmp.eq.s32.totalorder %s29, 0
      %p58 = por %p56, %p57
      %s59 = ssub.s32 %s23, %s30
      %p60 = scmp.eq.s32.totalorder %s59, 0
      %s62 = sadd.s32 %s61, 1
      %s63 = scalar_select %p60, %s61, %s62
      %p66 = pneg %p60
      %p67 = scmp.eq.s32.totalorder %s23, 1
      %p68 = por %p66, %p67
      %p69 = scmp.ne.s32.totalorder %s61, %s64
      %p70 = scmp.eq.s32.totalorder %s23, 0
      %p71 = por %p69, %p70
      %p72 = scmp.ne.s32.totalorder %s61, %s64
      %p73 = scmp.eq.s32.totalorder %s28, 1
      %p74 = por %p72, %p73
      %p75 = scmp.ne.s32.totalorder %s64, %s65
      %p76 = scmp.eq.s32.totalorder %s28, 0
      %p77 = por %p75, %p76
      %p78 = scmp.ne.s32.totalorder %s64, %s65
      %p79 = scmp.eq.s32.totalorder %s29, 1
      %p80 = por %p78, %p79
      %p82 = scmp.ne.s32.totalorder %s65, %s81
      %p83 = scmp.eq.s32.totalorder %s29, 0
      %p84 = por %p82, %p83
      %p85 = scmp.le.s32.totalorder 1, %s23
      %p86 = scmp.lt.s32.totalorder %s23, 3
      %p87 = pnand %p85, %p86
      %p88 = pneg %p87
      // Predicated region
      $region9: #{tpu_custom_call.1} parent=5 // pred_check
        _
      $region10: #{tpu_custom_call.1} parent=5 // pred_check_branch
        %90 = sbr.rel (%p87) target = $region12
      $region11: #{tpu_custom_call.1} parent=5 // pred_region
        %s91 = ssub.s32 %s23, 1
      $region12: #{tpu_custom_call.1} parent=5 // pred_fallthru
        _
      %p92 = scmp.lt.s32.totalorder %s23, 2
      // Predicated region
      $region13: #{tpu_custom_call.1} parent=5 // pred_check
        %p93 = pneg %p92
      $region14: #{tpu_custom_call.1} parent=5 // pred_check_branch
        %95 = sbr.rel (%p93) target = $region16
      $region15: #{tpu_custom_call.1} parent=5 // pred_region
        // Predicated region
        $region17: #{tpu_custom_call.1} parent=15 // pred_check
          %p96 = pneg %p45
        $region18: #{tpu_custom_call.1} parent=15 // pred_check_branch
          %98 = sbr.rel (%p96) target = $region20
        $region19: #{tpu_custom_call.1} parent=15 // pred_region
          %s99 = sand.u32 %s35, 1
          %s100 = scalar_lea.sflag [#allocation6], %s99
          %s101 = sand.u32 %s35, 1
          %s102 = smul.addr %s101, 2
          %s103 = scalar_lea.vmem [#allocation5], %s102
          %s104 = sld [smem:[#allocation3 + %s23]]
          %s106 = ssub.s32 32, 32
          %107 = vsyncadd %s100, %s106
          %s108 = smul.addr %s104, 32
          %s109 = scalar_lea.hbm %s2, %s108
          %s111 = sshll.u32 %s103, 4
          %s112 = int_to_ptr.vmem [resolvable:$true] %s111
          %114 = dma.hbm_to_vmem [thread:$0]  %s109, 32, %s112, %s100
        $region20: #{tpu_custom_call.1} parent=15 // pred_fallthru
          _
      $region16: #{tpu_custom_call.1} parent=5 // pred_fallthru
        _
      %p115 = scmp.le.s32.totalorder 1, %s23
      %p116 = scmp.lt.s32.totalorder %s23, 3
      %p117 = pnand %p115, %p116
      %p118 = pneg %p117
      // Predicated region
      $region21: #{tpu_custom_call.1} parent=5 // pred_check
        _
      $region22: #{tpu_custom_call.1} parent=5 // pred_check_branch
        %120 = sbr.rel (%p117) target = $region24
      $region23: #{tpu_custom_call.1} parent=5 // pred_region
        %s121 = ssub.s32 %s23, 1
        %s122 = sand.u32 %s38, 1
        %s123 = scalar_lea.sflag [#allocation6], %s122
        %s124 = sand.u32 %s38, 1
        %s125 = smul.addr %s124, 2
        %s126 = scalar_lea.vmem [#allocation5], %s125
        // Predicated region
        $region25: #{tpu_custom_call.1} parent=23 // pred_check
          %p127 = pneg %p51
        $region26: #{tpu_custom_call.1} parent=23 // pred_check_branch
          %129 = sbr.rel (%p127) target = $region28
        $region27: #{tpu_custom_call.1} parent=23 // pred_region
          %130 = dma.done %s123, 32
        $region28: #{tpu_custom_call.1} parent=23 // pred_fallthru
          _
        %s131 = sand.u32 %s38, 1
        %s132 = scalar_lea.sflag [#allocation6], %s131
        %s133 = sand.u32 %s38, 1
        %s134 = smul.addr %s133, 2
        %s135 = scalar_lea.vmem [#allocation5], %s134
        %p136 = pneg %p51
        %p137 = pneg %p48
        %p138 = pneg %p77
        %p139 = pneg %p74
        %s140 = sand.u32 %s64, 1
        %s141 = scalar_lea.sflag [#allocation7], %s140
        %s142 = sand.u32 %s64, 1
        %s143 = smul.addr %s142, 2
        %s144 = scalar_lea.vmem [#allocation8], %s143
        %s145 = sld [smem:[#allocation3 + %s28]]
        %s146 = sld [smem:[#allocation4 + %s28]]
        %s147 = scvt.s32.f32 %s146
        %v148 = vld [vmem:[%s126] sm:$0x3]
        %v149 = vstv %s147
        %vm150 = vcmp.eq.f32.partialorder %v148, %v149
        %v151 = vsel %vm150, 1.0, 0.0
        %152 = vst [vmem:[%s144] sm:$0x3] %v151
        %s153 = sand.u32 %s64, 1
        %s154 = scalar_lea.sflag [#allocation7], %s153
        %s155 = sand.u32 %s64, 1
        %s156 = smul.addr %s155, 2
        %s157 = scalar_lea.vmem [#allocation8], %s156
        // Predicated region
        $region29: #{tpu_custom_call.1} parent=23 // pred_check
          %p158 = pneg %p74
        $region30: #{tpu_custom_call.1} parent=23 // pred_check_branch
          %160 = sbr.rel (%p158) target = $region32
        $region31: #{tpu_custom_call.1} parent=23 // pred_region
          %s162 = ssub.s32 32, 32
          %163 = vsyncadd %s154, %s162
          %s164 = smul.addr %s28, 32
          %s165 = scalar_lea.hbm %s3, %s164
          %s167 = sshll.u32 %s157, 4
          %s168 = int_to_ptr.vmem [resolvable:$true] %s167
          %170 = dma.vmem_to_hbm [thread:$0]  %s168, 32, %s165, %s154
        $region32: #{tpu_custom_call.1} parent=23 // pred_fallthru
          _
      $region24: #{tpu_custom_call.1} parent=5 // pred_fallthru
        _
      %p171 = scmp.le.s32.totalorder 2, %s23
      // Predicated region
      $region33: #{tpu_custom_call.1} parent=5 // pred_check
        %p172 = pneg %p171
      $region34: #{tpu_custom_call.1} parent=5 // pred_check_branch
        %174 = sbr.rel (%p172) target = $region36
      $region35: #{tpu_custom_call.1} parent=5 // pred_region
        %s175 = ssub.s32 %s23, 2
        // Predicated region
        $region37: #{tpu_custom_call.1} parent=35 // pred_check
          %p176 = pneg %p80
        $region38: #{tpu_custom_call.1} parent=35 // pred_check_branch
          %178 = sbr.rel (%p176) target = $region40
        $region39: #{tpu_custom_call.1} parent=35 // pred_region
          %s179 = sand.u32 %s65, 1
          %s180 = scalar_lea.sflag [#allocation7], %s179
          %s181 = sand.u32 %s65, 1
          %s182 = smul.addr %s181, 2
          %s183 = scalar_lea.vmem [#allocation8], %s182
          %184 = dma.done %s180, 32
        $region40: #{tpu_custom_call.1} parent=35 // pred_fallthru
          _
      $region36: #{tpu_custom_call.1} parent=5 // pred_fallthru
        _
    $region6: #{tpu_custom_call.1} parent=1 // loop_footer
      %s27 = sadd.s32 1, %s23
    $region7: #{tpu_custom_call.1} parent=1 // loop_footer_branch
      %22 = sbr.rel target = $region3
    $region8: #{tpu_custom_call.1} parent=1 // loop_exit
      _
    %185 = vsyncpa [#allocation6], 1
    %s186 = scalar_lea.sflag [#allocation6], 1
    %187 = vsyncpa %s186, 1
    %188 = vsyncpa [#allocation7], 1
    %s189 = scalar_lea.sflag [#allocation7], 1
    %190 = vsyncpa %s189, 1

</llo_original>
